<compile_context>
chip_gen: v5e
topology: v5e:2x2
jax: 0.10.0
libtpu: 0.0.40
codegen_flags: <defaults>
</compile_context>

<pallas_src>
import math

import jax
import jax.numpy as jnp
from jax.experimental import pallas as pl
from jax.experimental.pallas import tpu as pltpu

LANE = 128  # TPU vreg lane width


def _round_up(x, m):
    return ((x + m - 1) // m) * m


def autoencoder_kernel(x_ref,
                       w1_ref, b1_ref,
                       w2_ref, b2_ref,
                       w3_ref, b3_ref,
                       w4_ref, b4_ref,
                       out_ref):
    """One batch tile: out = relu(relu(relu(x@W1+b1)@W2+b2)@W3+b3)@W4+b4."""
    x = x_ref[...]

    # ---- Encoder ----
    h = jnp.dot(x, w1_ref[...], preferred_element_type=jnp.float32) + b1_ref[...]
    h = jnp.maximum(h, 0.0)
    h = jnp.dot(h, w2_ref[...], preferred_element_type=jnp.float32) + b2_ref[...]
    h = jnp.maximum(h, 0.0)

    # ---- Decoder ----
    h = jnp.dot(h, w3_ref[...], preferred_element_type=jnp.float32) + b3_ref[...]
    h = jnp.maximum(h, 0.0)
    out = jnp.dot(h, w4_ref[...], preferred_element_type=jnp.float32) + b4_ref[...]

    out_ref[...] = out.astype(out_ref.dtype)


def vanilla_autoencoder_forward(x, params, *, tile_b=4096, core_parallel=False):
    """x: (batch, input_dim).  params: dict of W1..W4 (in, out) and b1..b4 (1, out).

    core_parallel=True is intended for v7x (2 TensorCores/chip); it requires
    the batch grid to have >= 2 steps to help.
    """
    batch, input_dim = x.shape
    hidden_dim = params["W1"].shape[1]
    half_dim = params["W2"].shape[1]

    # Lane-dense (multiple-of-128) hidden dims for the resident weights only.
    hid_p = _round_up(hidden_dim, LANE)
    half_p = _round_up(half_dim, LANE)

    def pad2(a, rows, cols):
        pr, pc = rows - a.shape[0], cols - a.shape[1]
        if pr == 0 and pc == 0:
            return a
        return jnp.pad(a, ((0, pr), (0, pc)))

    # Weights/biases: tiny, DMA'd to VMEM once (constant index_map) and kept
    # resident.  Zero padding keeps results bit-identical: padded activation
    # lanes are relu(0 + 0) = 0 and padded weight rows contribute nothing.
    W1 = pad2(params["W1"], input_dim, hid_p)
    b1 = pad2(params["b1"], 1, hid_p)
    W2 = pad2(params["W2"], hid_p, half_p)
    b2 = pad2(params["b2"], 1, half_p)
    W3 = pad2(params["W3"], half_p, hid_p)
    b3 = pad2(params["b3"], 1, hid_p)
    W4 = pad2(params["W4"], hid_p, input_dim)
    b4 = pad2(params["b4"], 1, input_dim)

    # Batch tiling.  If the whole batch fits one tile, use a single full-batch
    # block (block dim == full array dim -> no sublane-divisibility issue).
    # Otherwise use a multiple-of-8 tile; a ragged last tile is handled by
    # Pallas (OOB reads are don't-care rows, OOB writes are dropped).
    if batch <= tile_b:
        tile_b = batch
    else:
        tile_b = max(8, (tile_b // 8) * 8)
    grid = (pl.cdiv(batch, tile_b),)

    def resident(shape):
        # Constant index_map: block never changes -> DMA'd once, stays in VMEM.
        # (For scaled-up weights on v7x, add pipeline_mode=pl.Buffered(1) here
        #  to avoid double-buffering ~tens of MiB of resident weights.)
        return pl.BlockSpec(shape, lambda i: (0, 0))

    if core_parallel:
        dim_sem = (pltpu.CORE_PARALLEL,)   # real 2-TC split on v7x
    else:
        dim_sem = ("arbitrary",)           # "parallel" measures ~identical

    itemsize = x.dtype.itemsize
    w_elems = (input_dim * hid_p + hid_p * half_p
               + half_p * hid_p + hid_p * input_dim)
    flops = 2 * batch * w_elems
    bytes_accessed = (batch * input_dim * itemsize * 2       # x in + out
                      + w_elems * 4                          # resident weights
                      + (2 * hid_p + half_p + input_dim) * 4)  # biases

    out = pl.pallas_call(
        autoencoder_kernel,
        out_shape=jax.ShapeDtypeStruct((batch, input_dim), x.dtype),
        grid=grid,
        in_specs=[
            pl.BlockSpec((tile_b, input_dim), lambda i: (i, 0)),  # x: batch-tiled
            resident(W1.shape), resident(b1.shape),
            resident(W2.shape), resident(b2.shape),
            resident(W3.shape), resident(b3.shape),
            resident(W4.shape), resident(b4.shape),
        ],
        out_specs=pl.BlockSpec((tile_b, input_dim), lambda i: (i, 0)),
        compiler_params=pltpu.CompilerParams(dimension_semantics=dim_sem),
        cost_estimate=pl.CostEstimate(flops=int(flops), transcendentals=0,
                                      bytes_accessed=int(bytes_accessed)),
    )(x, W1, b1, W2, b2, W3, b3, W4, b4)
    return out


def init_linear(key, fan_in, fan_out):
    """PyTorch nn.Linear default init: U(-1/sqrt(fan_in), 1/sqrt(fan_in))."""
    kw, kb = jax.random.split(key)
    bound = 1.0 / math.sqrt(fan_in)
    # Stored as (in, out) so the kernel computes x @ W directly
    # (equivalent to PyTorch's x @ weight.T with weight of shape (out, in)).
    w = jax.random.uniform(kw, (fan_in, fan_out), jnp.float32, -bound, bound)
    b = jax.random.uniform(kb, (1, fan_out), jnp.float32, -bound, bound)
    return w, b


def init_params(key, input_dim, hidden_dim):
    k1, k2, k3, k4 = jax.random.split(key, 4)
    half = hidden_dim // 2
    W1, b1 = init_linear(k1, input_dim, hidden_dim)
    W2, b2 = init_linear(k2, hidden_dim, half)
    W3, b3 = init_linear(k3, half, hidden_dim)
    W4, b4 = init_linear(k4, hidden_dim, input_dim)
    return {"W1": W1, "b1": b1, "W2": W2, "b2": b2,
            "W3": W3, "b3": b3, "W4": W4, "b4": b4}


def reference_forward(x, p):
    h1 = jnp.maximum(x @ p["W1"] + p["b1"], 0.0)
    h2 = jnp.maximum(h1 @ p["W2"] + p["b2"], 0.0)
    h3 = jnp.maximum(h2 @ p["W3"] + p["b3"], 0.0)
    return h3 @ p["W4"] + p["b4"]


if __name__ == "__main__":
    key = jax.random.PRNGKey(0)
    k_params, k_x, k_x2, k_x3 = jax.random.split(key, 4)

    input_dim, hidden_dim = 64, 32
    params = init_params(k_params, input_dim, hidden_dim)

    # Small, spec-consistent shape: single full-batch block, grid=(1,).
    batch = 8
    x = jax.random.normal(k_x, (batch, input_dim), jnp.float32)
    out = jax.block_until_ready(vanilla_autoencoder_forward(x, params))
    ref = reference_forward(x, params)
    assert out.shape == (batch, input_dim)
    assert jnp.allclose(out, ref, atol=1e-5, rtol=1e-5)

    # Larger batch with an explicit small tile: exercises the multi-step batch
    # grid (grid=(4,), tile_b=512), evenly divided.
    batch2 = 2048
    x2 = jax.random.normal(k_x2, (batch2, input_dim), jnp.float32)
    out2 = jax.block_until_ready(
        vanilla_autoencoder_forward(x2, params, tile_b=512))
    ref2 = reference_forward(x2, params)
    assert out2.shape == (batch2, input_dim)
    assert jnp.allclose(out2, ref2, atol=1e-5, rtol=1e-5)

    # Ragged batch: 200 = 3*64 + 8 -> grid=(4,) with a partial last tile.
    # No wrapper-side padding of x and no output slicing.
    batch3 = 200
    x3 = jax.random.normal(k_x3, (batch3, input_dim), jnp.float32)
    out3 = jax.block_until_ready(
        vanilla_autoencoder_forward(x3, params, tile_b=64))
    ref3 = reference_forward(x3, params)
    assert out3.shape == (batch3, input_dim)
    assert jnp.allclose(out3, ref3, atol=1e-5, rtol=1e-5)

    print("KERNEL_OK")
</pallas_src>

<mosaic_0001>
module attributes {stable_mosaic.version = 11 : i64} {
  func.func @autoencoder_kernel(%arg0: i32, %arg1: memref<8x64xf32, #tpu.memory_space<vmem>>, %arg2: memref<64x128xf32, #tpu.memory_space<vmem>>, %arg3: memref<1x128xf32, #tpu.memory_space<vmem>>, %arg4: memref<128x128xf32, #tpu.memory_space<vmem>>, %arg5: memref<1x128xf32, #tpu.memory_space<vmem>>, %arg6: memref<128x128xf32, #tpu.memory_space<vmem>>, %arg7: memref<1x128xf32, #tpu.memory_space<vmem>>, %arg8: memref<128x64xf32, #tpu.memory_space<vmem>>, %arg9: memref<1x64xf32, #tpu.memory_space<vmem>>, %arg10: memref<8x64xf32, #tpu.memory_space<vmem>>) attributes {dimension_semantics = [#tpu.dimension_semantics<arbitrary>], iteration_bounds = array<i64: 1>, scalar_prefetch = 0 : i64, scratch_operands = 0 : i64, tpu.core_type = #tpu.core_type<tc>, window_params = [{transform_indices = @transform_0, window_bounds = array<i64: 8, 64>}, {pipeline_mode = #tpu.pipeline_mode<synchronous>, transform_indices = @transform_1, window_bounds = array<i64: 64, 128>}, {pipeline_mode = #tpu.pipeline_mode<synchronous>, transform_indices = @transform_2, window_bounds = array<i64: 1, 128>}, {pipeline_mode = #tpu.pipeline_mode<synchronous>, transform_indices = @transform_3, window_bounds = array<i64: 128, 128>}, {pipeline_mode = #tpu.pipeline_mode<synchronous>, transform_indices = @transform_4, window_bounds = array<i64: 1, 128>}, {pipeline_mode = #tpu.pipeline_mode<synchronous>, transform_indices = @transform_5, window_bounds = array<i64: 128, 128>}, {pipeline_mode = #tpu.pipeline_mode<synchronous>, transform_indices = @transform_6, window_bounds = array<i64: 1, 128>}, {pipeline_mode = #tpu.pipeline_mode<synchronous>, transform_indices = @transform_7, window_bounds = array<i64: 128, 64>}, {pipeline_mode = #tpu.pipeline_mode<synchronous>, transform_indices = @transform_8, window_bounds = array<i64: 1, 64>}, {transform_indices = @transform_9, window_bounds = array<i64: 8, 64>}]} {
    %c0 = arith.constant 0 : index
    %c0_0 = arith.constant 0 : index
    %0 = vector.load %arg1[%c0, %c0_0] : memref<8x64xf32, #tpu.memory_space<vmem>>, vector<8x64xf32>
    %c0_1 = arith.constant 0 : index
    %c0_2 = arith.constant 0 : index
    %1 = vector.load %arg2[%c0_1, %c0_2] : memref<64x128xf32, #tpu.memory_space<vmem>>, vector<64x128xf32>
    %cst = arith.constant dense<0.000000e+00> : vector<8x128xf32>
    %2 = tpu.matmul %0, %1, %cst {dimension_numbers = #tpu.dot_dimension_numbers<[1], [0], [0], [1], [0, 0, 1, 1], [], []>} : vector<8x64xf32>, vector<64x128xf32>, vector<8x128xf32> -> vector<8x128xf32>
    %c0_3 = arith.constant 0 : index
    %c0_4 = arith.constant 0 : index
    %3 = vector.load %arg3[%c0_3, %c0_4] : memref<1x128xf32, #tpu.memory_space<vmem>>, vector<1x128xf32>
    %4 = vector.broadcast %3 : vector<1x128xf32> to vector<8x128xf32>
    %5 = arith.addf %2, %4 : vector<8x128xf32>
    %cst_5 = arith.constant 0.000000e+00 : f32
    %6 = vector.broadcast %cst_5 : f32 to vector<8x128xf32>
    %7 = arith.maximumf %5, %6 : vector<8x128xf32>
    %c0_6 = arith.constant 0 : index
    %c0_7 = arith.constant 0 : index
    %8 = vector.load %arg4[%c0_6, %c0_7] : memref<128x128xf32, #tpu.memory_space<vmem>>, vector<128x128xf32>
    %cst_8 = arith.constant dense<0.000000e+00> : vector<8x128xf32>
    %9 = tpu.matmul %7, %8, %cst_8 {dimension_numbers = #tpu.dot_dimension_numbers<[1], [0], [0], [1], [0, 0, 1, 1], [], []>} : vector<8x128xf32>, vector<128x128xf32>, vector<8x128xf32> -> vector<8x128xf32>
    %c0_9 = arith.constant 0 : index
    %c0_10 = arith.constant 0 : index
    %10 = vector.load %arg5[%c0_9, %c0_10] : memref<1x128xf32, #tpu.memory_space<vmem>>, vector<1x128xf32>
    %11 = vector.broadcast %10 : vector<1x128xf32> to vector<8x128xf32>
    %12 = arith.addf %9, %11 : vector<8x128xf32>
    %cst_11 = arith.constant 0.000000e+00 : f32
    %13 = vector.broadcast %cst_11 : f32 to vector<8x128xf32>
    %14 = arith.maximumf %12, %13 : vector<8x128xf32>
    %c0_12 = arith.constant 0 : index
    %c0_13 = arith.constant 0 : index
    %15 = vector.load %arg6[%c0_12, %c0_13] : memref<128x128xf32, #tpu.memory_space<vmem>>, vector<128x128xf32>
    %cst_14 = arith.constant dense<0.000000e+00> : vector<8x128xf32>
    %16 = tpu.matmul %14, %15, %cst_14 {dimension_numbers = #tpu.dot_dimension_numbers<[1], [0], [0], [1], [0, 0, 1, 1], [], []>} : vector<8x128xf32>, vector<128x128xf32>, vector<8x128xf32> -> vector<8x128xf32>
    %c0_15 = arith.constant 0 : index
    %c0_16 = arith.constant 0 : index
    %17 = vector.load %arg7[%c0_15, %c0_16] : memref<1x128xf32, #tpu.memory_space<vmem>>, vector<1x128xf32>
    %18 = vector.broadcast %17 : vector<1x128xf32> to vector<8x128xf32>
    %19 = arith.addf %16, %18 : vector<8x128xf32>
    %cst_17 = arith.constant 0.000000e+00 : f32
    %20 = vector.broadcast %cst_17 : f32 to vector<8x128xf32>
    %21 = arith.maximumf %19, %20 : vector<8x128xf32>
    %c0_18 = arith.constant 0 : index
    %c0_19 = arith.constant 0 : index
    %22 = vector.load %arg8[%c0_18, %c0_19] : memref<128x64xf32, #tpu.memory_space<vmem>>, vector<128x64xf32>
    %cst_20 = arith.constant dense<0.000000e+00> : vector<8x64xf32>
    %23 = tpu.matmul %21, %22, %cst_20 {dimension_numbers = #tpu.dot_dimension_numbers<[1], [0], [0], [1], [0, 0, 1, 1], [], []>} : vector<8x128xf32>, vector<128x64xf32>, vector<8x64xf32> -> vector<8x64xf32>
    %c0_21 = arith.constant 0 : index
    %c0_22 = arith.constant 0 : index
    %24 = vector.load %arg9[%c0_21, %c0_22] : memref<1x64xf32, #tpu.memory_space<vmem>>, vector<1x64xf32>
    %25 = vector.broadcast %24 : vector<1x64xf32> to vector<8x64xf32>
    %26 = arith.addf %23, %25 : vector<8x64xf32>
    %c0_23 = arith.constant 0 : index
    %c0_24 = arith.constant 0 : index
    %27 = vector.load %arg10[%c0_23, %c0_24] : memref<8x64xf32, #tpu.memory_space<vmem>>, vector<8x64xf32>
    tpu.vector_store %arg10[%c0_23, %c0_24], %26 {strides = array<i32>} : memref<8x64xf32, #tpu.memory_space<vmem>>, vector<8x64xf32>,
    return
  }
  func.func @transform_0(%arg0: i32) -> (i32, i32) {
    %c0_i32 = arith.constant 0 : i32
    %c0_i32_0 = arith.constant 0 : i32
    return %arg0, %c0_i32 : i32, i32
  }
  func.func @transform_1(%arg0: i32) -> (i32, i32) {
    %c0_i32 = arith.constant 0 : i32
    %c0_i32_0 = arith.constant 0 : i32
    %c0_i32_1 = arith.constant 0 : i32
    return %c0_i32, %c0_i32_0 : i32, i32
  }
  func.func @transform_2(%arg0: i32) -> (i32, i32) {
    %c0_i32 = arith.constant 0 : i32
    %c0_i32_0 = arith.constant 0 : i32
    %c0_i32_1 = arith.constant 0 : i32
    return %c0_i32, %c0_i32_0 : i32, i32
  }
  func.func @transform_3(%arg0: i32) -> (i32, i32) {
    %c0_i32 = arith.constant 0 : i32
    %c0_i32_0 = arith.constant 0 : i32
    %c0_i32_1 = arith.constant 0 : i32
    return %c0_i32, %c0_i32_0 : i32, i32
  }
  func.func @transform_4(%arg0: i32) -> (i32, i32) {
    %c0_i32 = arith.constant 0 : i32
    %c0_i32_0 = arith.constant 0 : i32
    %c0_i32_1 = arith.constant 0 : i32
    return %c0_i32, %c0_i32_0 : i32, i32
  }
  func.func @transform_5(%arg0: i32) -> (i32, i32) {
    %c0_i32 = arith.constant 0 : i32
    %c0_i32_0 = arith.constant 0 : i32
    %c0_i32_1 = arith.constant 0 : i32
    return %c0_i32, %c0_i32_0 : i32, i32
  }
  func.func @transform_6(%arg0: i32) -> (i32, i32) {
    %c0_i32 = arith.constant 0 : i32
    %c0_i32_0 = arith.constant 0 : i32
    %c0_i32_1 = arith.constant 0 : i32
    return %c0_i32, %c0_i32_0 : i32, i32
  }
  func.func @transform_7(%arg0: i32) -> (i32, i32) {
    %c0_i32 = arith.constant 0 : i32
    %c0_i32_0 = arith.constant 0 : i32
    %c0_i32_1 = arith.constant 0 : i32
    return %c0_i32, %c0_i32_0 : i32, i32
  }
  func.func @transform_8(%arg0: i32) -> (i32, i32) {
    %c0_i32 = arith.constant 0 : i32
    %c0_i32_0 = arith.constant 0 : i32
    %c0_i32_1 = arith.constant 0 : i32
    return %c0_i32, %c0_i32_0 : i32, i32
  }
  func.func @transform_9(%arg0: i32) -> (i32, i32) {
    %c0_i32 = arith.constant 0 : i32
    %c0_i32_0 = arith.constant 0 : i32
    return %arg0, %c0_i32 : i32, i32
  }
}

</mosaic_0001>

<llo_original>
// kernel: tpu_custom_call.1
$region0: #{tpu_custom_call.1}
  #allocation0 [shape = 'u32[]', space=smem, size = 0x4, offset = 0x4, fixed_abs, tag = 'smem constant byte address 0x4 - core index']
  #allocation1 [shape = 'u32[72,128]{1,0:T(1,128)}', space=vmem, size = 0x9000, scoped, tag = 'internal scratch']
  %s0 = inlined_call_operand.hbm [shape: f32[8,64], index: 0, kind: input, shape index: {}]
  %s1 = inlined_call_operand.vmem [shape: f32[64,128], index: 1, kind: input, shape index: {}]
  %s2 = inlined_call_operand.vmem [shape: f32[1,128], index: 2, kind: input, shape index: {}]
  %s3 = inlined_call_operand.vmem [shape: f32[128,128], index: 3, kind: input, shape index: {}]
  %s4 = inlined_call_operand.vmem [shape: f32[1,128], index: 4, kind: input, shape index: {}]
  %s5 = inlined_call_operand.hbm [shape: f32[128,128], index: 5, kind: input, shape index: {}]
  %s6 = inlined_call_operand.vmem [shape: f32[1,128], index: 6, kind: input, shape index: {}]
  %s7 = inlined_call_operand.vmem [shape: f32[128,64], index: 7, kind: input, shape index: {}]
  %s8 = inlined_call_operand.vmem [shape: f32[1,64], index: 8, kind: input, shape index: {}]
  %s9 = inlined_call_operand.hbm [shape: f32[8,64], index: 9, kind: output, shape index: {}]
  %s10 = sld [smem:[#allocation0]]
  $region54: #{tpu_custom_call.1} parent=0
    _
  %s12 = ssub.s32 1, %s10
  %s13 = scalar_select 0, %s12, %s10
  $region1: #{tpu_custom_call.1} parent=0
    #allocation2 [shape = 'u8[4096]{0}', space=vmem, size = 0x1000, scoped, tag = 'input window, operand 0, single buffered']
    #allocation3 [shape = 's32[1]{0}', space=sflag, size = 0x4, scoped, tag = 'scoped memory for tpu_custom_call.1']
    #allocation4 [shape = 's32[1]{0}', space=sflag, size = 0x4, scoped, tag = 'scoped memory for tpu_custom_call.1']
    #allocation5 [shape = 'u8[65536]{0}', space=vmem, size = 0x10000, scoped, tag = 'input window, operand 5, single buffered']
    #allocation6 [shape = 's32[1]{0}', space=sflag, size = 0x4, scoped, tag = 'scoped memory for tpu_custom_call.1']
    #allocation7 [shape = 'u8[4096]{0}', space=vmem, size = 0x1000, scoped, tag = 'output window, operand 0, single buffered']
    %14 = vsyncpa [#allocation3], 0
    %15 = vsyncpa [#allocation6], 0
    %16 = vsyncpa [#allocation4], 0
    // Predicated region
    $region2: #{tpu_custom_call.1} parent=1 // pred_check
      _
    $region3: #{tpu_custom_call.1} parent=1 // pred_check_branch
      %18 = sbr.rel (0) target = $region5
    $region4: #{tpu_custom_call.1} parent=1 // pred_region
      %20 = vsyncadd [#allocation3], 0
      %s22 = sshll.u32 %s0, 4
      %s23 = int_to_ptr.hbm [resolvable:$true] %s22
      %s24 = sshll.u32 [#allocation2], 4
      %s25 = int_to_ptr.vmem [resolvable:$true] %s24
      %27 = dma.hbm_to_vmem [thread:$0]  %s23, 128, %s25, [#allocation3]
    $region5: #{tpu_custom_call.1} parent=1 // pred_fallthru
      _
    // Predicated region
    $region6: #{tpu_custom_call.1} parent=1 // pred_check
      _
    $region7: #{tpu_custom_call.1} parent=1 // pred_check_branch
      %29 = sbr.rel (0) target = $region9
    $region8: #{tpu_custom_call.1} parent=1 // pred_region
      _
    $region9: #{tpu_custom_call.1} parent=1 // pred_fallthru
      _
    // Predicated region
    $region10: #{tpu_custom_call.1} parent=1 // pred_check
      _
    $region11: #{tpu_custom_call.1} parent=1 // pred_check_branch
      %31 = sbr.rel (0) target = $region13
    $region12: #{tpu_custom_call.1} parent=1 // pred_region
      _
    $region13: #{tpu_custom_call.1} parent=1 // pred_fallthru
      _
    // Predicated region
    $region14: #{tpu_custom_call.1} parent=1 // pred_check
      _
    $region15: #{tpu_custom_call.1} parent=1 // pred_check_branch
      %33 = sbr.rel (0) target = $region17
    $region16: #{tpu_custom_call.1} parent=1 // pred_region
      _
    $region17: #{tpu_custom_call.1} parent=1 // pred_fallthru
      _
    // Predicated region
    $region18: #{tpu_custom_call.1} parent=1 // pred_check
      _
    $region19: #{tpu_custom_call.1} parent=1 // pred_check_branch
      %35 = sbr.rel (0) target = $region21
    $region20: #{tpu_custom_call.1} parent=1 // pred_region
      _
    $region21: #{tpu_custom_call.1} parent=1 // pred_fallthru
      _
    // Predicated region
    $region22: #{tpu_custom_call.1} parent=1 // pred_check
      _
    $region23: #{tpu_custom_call.1} parent=1 // pred_check_branch
      %37 = sbr.rel (0) target = $region25
    $region24: #{tpu_custom_call.1} parent=1 // pred_region
      %39 = vsyncadd [#allocation6], 0
      %s40 = sshll.u32 %s5, 4
      %s41 = int_to_ptr.hbm [resolvable:$true] %s40
      %s42 = sshll.u32 [#allocation5], 4
      %s43 = int_to_ptr.vmem [resolvable:$true] %s42
      %48 = dma.hbm_to_vmem [thread:$0]  %s41, 2048, %s43, [#allocation6], 128, 128, 8
    $region25: #{tpu_custom_call.1} parent=1 // pred_fallthru
      _
    // Predicated region
    $region26: #{tpu_custom_call.1} parent=1 // pred_check
      _
    $region27: #{tpu_custom_call.1} parent=1 // pred_check_branch
      %50 = sbr.rel (0) target = $region29
    $region28: #{tpu_custom_call.1} parent=1 // pred_region
      _
    $region29: #{tpu_custom_call.1} parent=1 // pred_fallthru
      _
    // Predicated region
    $region30: #{tpu_custom_call.1} parent=1 // pred_check
      _
    $region31: #{tpu_custom_call.1} parent=1 // pred_check_branch
      %52 = sbr.rel (0) target = $region33
    $region32: #{tpu_custom_call.1} parent=1 // pred_region
      _
    $region33: #{tpu_custom_call.1} parent=1 // pred_fallthru
      _
    // Predicated region
    $region34: #{tpu_custom_call.1} parent=1 // pred_check
      _
    $region35: #{tpu_custom_call.1} parent=1 // pred_check_branch
      %54 = sbr.rel (0) target = $region37
    $region36: #{tpu_custom_call.1} parent=1 // pred_region
      _
    $region37: #{tpu_custom_call.1} parent=1 // pred_fallthru
      _
    // Predicated region
    $region38: #{tpu_custom_call.1} parent=1 // pred_check
      _
    $region39: #{tpu_custom_call.1} parent=1 // pred_check_branch
      %56 = sbr.rel (0) target = $region41
    $region40: #{tpu_custom_call.1} parent=1 // pred_region
      %58 = dma.done [#allocation3], 128
    $region41: #{tpu_custom_call.1} parent=1 // pred_fallthru
      _
    // Predicated region
    $region42: #{tpu_custom_call.1} parent=1 // pred_check
      _
    $region43: #{tpu_custom_call.1} parent=1 // pred_check_branch
      %60 = sbr.rel (0) target = $region45
    $region44: #{tpu_custom_call.1} parent=1 // pred_region
      %62 = dma.done [#allocation6], 2048
    $region45: #{tpu_custom_call.1} parent=1 // pred_fallthru
      _
    %v63 = vld [vmem:[#allocation2] sm:$0xff]
    %v64 = vld [vmem:[%s1] sm:$0xff]
    %v65 = vld [vmem:[%s1 + $0x8] sm:$0xff]
    %v66 = vld [vmem:[%s1 + $0x10] sm:$0xff]
    %v67 = vld [vmem:[%s1 + $0x18] sm:$0xff]
    %v68 = vld [vmem:[%s1 + $0x20] sm:$0xff]
    %v69 = vld [vmem:[%s1 + $0x28] sm:$0xff]
    %v70 = vld [vmem:[%s1 + $0x30] sm:$0xff]
    %v71 = vld [vmem:[%s1 + $0x38] sm:$0xff]
    %v72 = vld [vmem:[%s2] sm:$0x1]
    %v74 = vperm.slane %v72, 0
    %vm76 = vcmask 523264
    %v78 = vsel %vm76, %v63, 0
    %80 = vmatpush.msra.mxu0 0.0
    %81 = vmatpush.msra.mxu0 0.0
    %82 = vmatpush.msra.mxu0 0.0
    %83 = vmatpush.msra.mxu0 0.0
    %84 = vmatpush.msra.mxu0 0.0
    %85 = vmatpush.msra.mxu0 0.0
    %86 = vmatpush.msra.mxu0 0.0
    %87 = vmatpush.msra.mxu0 0.0
    %88 = vmatpush.msra.mxu0 %v71
    %89 = vmatpush.msra.mxu0 %v70
    %90 = vmatpush.msra.mxu0 %v69
    %91 = vmatpush.msra.mxu0 %v68
    %92 = vmatpush.msra.mxu0 %v67
    %93 = vmatpush.msra.mxu0 %v66
    %94 = vmatpush.msra.mxu0 %v65
    %95 = vmatpush.msra.mxu0 %v64
    %96 = vmatmul.f32.gmra.mxu0 %v78
    %v97 = vpop.f32.mrf.mxu0
    %v98 = vadd.f32 %v74, %v97
    %99 = vdwg.mxu0
    %v100 = vmax.f32 %v98, 0.0
    %v101 = vld [vmem:[%s3] sm:$0xff]
    %v102 = vld [vmem:[%s3 + $0x8] sm:$0xff]
    %v103 = vld [vmem:[%s3 + $0x10] sm:$0xff]
    %v104 = vld [vmem:[%s3 + $0x18] sm:$0xff]
    %v105 = vld [vmem:[%s3 + $0x20] sm:$0xff]
    %v106 = vld [vmem:[%s3 + $0x28] sm:$0xff]
    %v107 = vld [vmem:[%s3 + $0x30] sm:$0xff]
    %v108 = vld [vmem:[%s3 + $0x38] sm:$0xff]
    %v109 = vld [vmem:[%s3 + $0x40] sm:$0xff]
    %v110 = vld [vmem:[%s3 + $0x48] sm:$0xff]
    %v111 = vld [vmem:[%s3 + $0x50] sm:$0xff]
    %v112 = vld [vmem:[%s3 + $0x58] sm:$0xff]
    %v113 = vld [vmem:[%s3 + $0x60] sm:$0xff]
    %v114 = vld [vmem:[%s3 + $0x68] sm:$0xff]
    %v115 = vld [vmem:[%s3 + $0x70] sm:$0xff]
    %v116 = vld [vmem:[%s3 + $0x78] sm:$0xff]
    %v117 = vld [vmem:[%s4] sm:$0x1]
    %v119 = vperm.slane %v117, 0
    %121 = vmatpush.msra.mxu0 %v116
    %122 = vmatpush.msra.mxu0 %v115
    %123 = vmatpush.msra.mxu0 %v114
    %124 = vmatpush.msra.mxu0 %v113
    %125 = vmatpush.msra.mxu0 %v112
    %126 = vmatpush.msra.mxu0 %v111
    %127 = vmatpush.msra.mxu0 %v110
    %128 = vmatpush.msra.mxu0 %v109
    %129 = vmatpush.msra.mxu0 %v108
    %130 = vmatpush.msra.mxu0 %v107
    %131 = vmatpush.msra.mxu0 %v106
    %132 = vmatpush.msra.mxu0 %v105
    %133 = vmatpush.msra.mxu0 %v104
    %134 = vmatpush.msra.mxu0 %v103
    %135 = vmatpush.msra.mxu0 %v102
    %136 = vmatpush.msra.mxu0 %v101
    %137 = vmatmul.f32.gmra.mxu0 %v100
    %v138 = vpop.f32.mrf.mxu0
    %v139 = vadd.f32 %v119, %v138
    %140 = vdwg.mxu0
    %v141 = vmax.f32 %v139, 0.0
    %v142 = vld [vmem:[#allocation5] sm:$0xff]
    %v143 = vld [vmem:[#allocation5 + $0x8] sm:$0xff]
    %v144 = vld [vmem:[#allocation5 + $0x10] sm:$0xff]
    %v145 = vld [vmem:[#allocation5 + $0x18] sm:$0xff]
    %v146 = vld [vmem:[#allocation5 + $0x20] sm:$0xff]
    %v147 = vld [vmem:[#allocation5 + $0x28] sm:$0xff]
    %v148 = vld [vmem:[#allocation5 + $0x30] sm:$0xff]
    %v149 = vld [vmem:[#allocation5 + $0x38] sm:$0xff]
    %v150 = vld [vmem:[#allocation5 + $0x40] sm:$0xff]
    %v151 = vld [vmem:[#allocation5 + $0x48] sm:$0xff]
    %v152 = vld [vmem:[#allocation5 + $0x50] sm:$0xff]
    %v153 = vld [vmem:[#allocation5 + $0x58] sm:$0xff]
    %v154 = vld [vmem:[#allocation5 + $0x60] sm:$0xff]
    %v155 = vld [vmem:[#allocation5 + $0x68] sm:$0xff]
    %v156 = vld [vmem:[#allocation5 + $0x70] sm:$0xff]
    %v157 = vld [vmem:[#allocation5 + $0x78] sm:$0xff]
    %v158 = vld [vmem:[%s6] sm:$0x1]
    %v160 = vperm.slane %v158, 0
    %162 = vmatpush.msra.mxu0 %v157
    %163 = vmatpush.msra.mxu0 %v156
    %164 = vmatpush.msra.mxu0 %v155
    %165 = vmatpush.msra.mxu0 %v154
    %166 = vmatpush.msra.mxu0 %v153
    %167 = vmatpush.msra.mxu0 %v152
    %168 = vmatpush.msra.mxu0 %v151
    %169 = vmatpush.msra.mxu0 %v150
    %170 = vmatpush.msra.mxu0 %v149
    %171 = vmatpush.msra.mxu0 %v148
    %172 = vmatpush.msra.mxu0 %v147
    %173 = vmatpush.msra.mxu0 %v146
    %174 = vmatpush.msra.mxu0 %v145
    %175 = vmatpush.msra.mxu0 %v144
    %176 = vmatpush.msra.mxu0 %v143
    %177 = vmatpush.msra.mxu0 %v142
    %178 = vmatmul.f32.gmra.mxu0 %v141
    %v179 = vpop.f32.mrf.mxu0
    %v180 = vadd.f32 %v160, %v179
    %181 = vdwg.mxu0
    %v182 = vmax.f32 %v180, 0.0
    %v183 = vld [vmem:[%s7] sm:$0xff]
    %v184 = vld [vmem:[%s7 + $0x8] sm:$0xff]
    %v185 = vld [vmem:[%s7 + $0x10] sm:$0xff]
    %v186 = vld [vmem:[%s7 + $0x18] sm:$0xff]
    %v187 = vld [vmem:[%s7 + $0x20] sm:$0xff]
    %v188 = vld [vmem:[%s7 + $0x28] sm:$0xff]
    %v189 = vld [vmem:[%s7 + $0x30] sm:$0xff]
    %v190 = vld [vmem:[%s7 + $0x38] sm:$0xff]
    %v191 = vld [vmem:[%s7 + $0x40] sm:$0xff]
    %v192 = vld [vmem:[%s7 + $0x48] sm:$0xff]
    %v193 = vld [vmem:[%s7 + $0x50] sm:$0xff]
    %v194 = vld [vmem:[%s7 + $0x58] sm:$0xff]
    %v195 = vld [vmem:[%s7 + $0x60] sm:$0xff]
    %v196 = vld [vmem:[%s7 + $0x68] sm:$0xff]
    %v197 = vld [vmem:[%s7 + $0x70] sm:$0xff]
    %v198 = vld [vmem:[%s7 + $0x78] sm:$0xff]
    %v199 = vld [vmem:[%s8] sm:$0x1]
    %v201 = vperm.slane %v199, 0
    %203 = vmatpush.msra.mxu0 %v198
    %204 = vmatpush.msra.mxu0 %v197
    %205 = vmatpush.msra.mxu0 %v196
    %206 = vmatpush.msra.mxu0 %v195
    %207 = vmatpush.msra.mxu0 %v194
    %208 = vmatpush.msra.mxu0 %v193
    %209 = vmatpush.msra.mxu0 %v192
    %210 = vmatpush.msra.mxu0 %v191
    %211 = vmatpush.msra.mxu0 %v190
    %212 = vmatpush.msra.mxu0 %v189
    %213 = vmatpush.msra.mxu0 %v188
    %214 = vmatpush.msra.mxu0 %v187
    %215 = vmatpush.msra.mxu0 %v186
    %216 = vmatpush.msra.mxu0 %v185
    %217 = vmatpush.msra.mxu0 %v184
    %218 = vmatpush.msra.mxu0 %v183
    %219 = vmatmul.f32.gmra.mxu0 %v182
    %v220 = vpop.f32.mrf.mxu0
    %v221 = vadd.f32 %v201, %v220
    %222 = vdwg.mxu0
    %223 = vst.msk [vmem:[#allocation7] sm:$0xff] %vm76, %v221
    // Predicated region
    $region46: #{tpu_custom_call.1} parent=1 // pred_check
      _
    $region47: #{tpu_custom_call.1} parent=1 // pred_check_branch
      %225 = sbr.rel (0) target = $region49
    $region48: #{tpu_custom_call.1} parent=1 // pred_region
      %227 = vsyncadd [#allocation4], 0
      %s229 = sshll.u32 [#allocation7], 4
      %s230 = int_to_ptr.vmem [resolvable:$true] %s229
      %s231 = sshll.u32 %s9, 4
      %s232 = int_to_ptr.hbm [resolvable:$true] %s231
      %234 = dma.vmem_to_hbm [thread:$0]  %s230, 128, %s232, [#allocation4]
    $region49: #{tpu_custom_call.1} parent=1 // pred_fallthru
      _
    // Predicated region
    $region50: #{tpu_custom_call.1} parent=1 // pred_check
      _
    $region51: #{tpu_custom_call.1} parent=1 // pred_check_branch
      %236 = sbr.rel (0) target = $region53
    $region52: #{tpu_custom_call.1} parent=1 // pred_region
      %238 = dma.done [#allocation4], 128
    $region53: #{tpu_custom_call.1} parent=1 // pred_fallthru
      _
    %239 = vsyncpa [#allocation3], 1
    %240 = vsyncpa [#allocation6], 1
    %241 = vsyncpa [#allocation4], 1

</llo_original>
